<compile_context>
chip_gen: v7x
topology: tpu7x:2x2x1
jax: 0.10.0
libtpu: 0.0.40
codegen_flags: <defaults>
</compile_context>

<pallas_src>
import jax
import jax.numpy as jnp
from jax.experimental import pallas as pl
from jax.experimental.pallas import tpu as pltpu

_LANES = 128
_SUBLANES = 8


def _rnn_classify_kernel(px_ref, whh_ref, wc_ref, bc_ref, out_ref):
    """px_ref:  (S, TB, H) bf16 pre-projected inputs (emb_proj gather), time-major.
    whh_ref: (H, H)  bf16 = W_hh^T
    wc_ref:  (H, Cp) bf16 = W_cls^T zero-padded to Cp=128 lanes
    bc_ref:  (1, Cp) f32  bias (padded)
    out_ref: (TB, Cp) f32 logits (padded lanes sliced off outside)."""
    S, TB, H = px_ref.shape
    w_hh = whh_ref[...]          # (H, H)  bf16, resident across the unrolled loop
    w_c = wc_ref[...]            # (H, Cp) bf16
    b_c = bc_ref[...]            # (1, Cp) f32

    # Independent batch sub-chains: each step's MXU push -> result pop -> add ->
    # tanh (EUP) chain is serial, so round-robining 2-4 chains inside the same
    # unrolled timestep fills the latency bubbles at zero extra FLOPs.
    if TB >= 256 and TB % 32 == 0:
        n_chunks = 4
    elif TB >= 16 and TB % 16 == 0:
        n_chunks = 2
    else:
        n_chunks = 1
    cb = TB // n_chunks

    # h_0 = 0 (PyTorch nn.RNN default initial hidden state); h kept vreg-resident.
    hs = [jnp.zeros((cb, H), jnp.float32) for _ in range(n_chunks)]
    for t in range(S):                              # S is compile-time -> static unroll
        for c in range(n_chunks):                   # interleaved independent chains
            pre = px_ref[t, pl.ds(c * cb, cb), :].astype(jnp.float32)
            rec = jnp.dot(hs[c].astype(jnp.bfloat16), w_hh,
                          preferred_element_type=jnp.float32)
            hs[c] = jnp.tanh(pre + rec)             # elementwise chain in f32 (v5e-friendly)

    # Classifier epilogue: bf16 MXU inputs, f32 accumulate, lane-dense per-chunk stores.
    for c in range(n_chunks):
        logits = jnp.dot(hs[c].astype(jnp.bfloat16), w_c,
                         preferred_element_type=jnp.float32) + b_c
        out_ref[pl.ds(c * cb, cb), :] = logits.astype(out_ref.dtype)


def _pick_batch_tile(B, S, H, *, vmem_budget_bytes=16 << 20, max_tile=256):
    """Largest batch tile (multiple of 8, capped) whose double-buffered bf16 (S, tb, H)
    input block fits the VMEM budget.  Big tiles amortize the ~0.35us per-grid-step
    overhead and give the MXU a full M dimension in the recurrence matmuls."""
    if B <= _SUBLANES:
        return B                                   # full-dim block, no 8-divisibility needed
    per_row = 2 * S * H * 2                        # double-buffered bf16 bytes per batch row
    cap = min(max_tile, max(_SUBLANES, vmem_budget_bytes // max(per_row, 1)))
    cap = max(_SUBLANES, (cap // _SUBLANES) * _SUBLANES)
    b_rounded = -(-B // _SUBLANES) * _SUBLANES
    return min(b_rounded, cap)


def rnn_classify_pallas(pre_x_tm, w_hh_t, w_cls_pad, b_cls_pad):
    """pre_x_tm: (S, B, H) bf16 time-major pre-projected inputs -> (B, Cp) f32 logits."""
    S, B, H = pre_x_tm.shape
    Cp = w_cls_pad.shape[1]

    tb = _pick_batch_tile(B, S, H)
    b_pad = -(-B // tb) * tb
    if b_pad != B:
        # Pad instead of asserting on the batch; padded rows are sliced off below.
        pre_x_tm = jnp.pad(pre_x_tm, ((0, 0), (0, b_pad - B), (0, 0)))
    grid = (b_pad // tb,)

    # TODO(synk): for long sequences, tile S (stream the gathered projection) instead of
    # keeping the whole (S, tb, H) block VMEM-resident; budget against v7x's 64 MiB VMEM.
    out = pl.pallas_call(
        _rnn_classify_kernel,
        out_shape=jax.ShapeDtypeStruct((b_pad, Cp), jnp.float32),
        grid_spec=pltpu.PrefetchScalarGridSpec(
            num_scalar_prefetch=0,
            grid=grid,
            in_specs=[
                pl.BlockSpec((S, tb, H), lambda i: (0, i, 0)),
                # Constant-index weights: revisited every grid step, no re-DMA.
                # TODO(synk): pipeline_mode=pl.Buffered(1) when H grows large enough for the
                # duplicate double-buffer copy to matter inside v7x's 64 MiB VMEM.
                pl.BlockSpec((H, H), lambda i: (0, 0)),
                pl.BlockSpec((H, Cp), lambda i: (0, 0)),
                pl.BlockSpec((1, Cp), lambda i: (0, 0)),
            ],
            out_specs=pl.BlockSpec((tb, Cp), lambda i: (i, 0)),
        ),
        compiler_params=pltpu.CompilerParams(
            dimension_semantics=("parallel",),      # independent batch tiles (megacore on v7x)
            vmem_limit_bytes=32 * 1024 * 1024,
        ),
    )(pre_x_tm, w_hh_t, w_cls_pad, b_cls_pad)
    return out[:B]


class MultiClassRNNModelPallas:
    """Forward-pass equivalent of the PyTorch MultiClassRNNModel."""

    def __init__(self, vector_dim, vocab_size, hidden_size, num_classes=6, key=None):
        if key is None:
            key = jax.random.PRNGKey(0)
        k_emb, k_ih, k_hh, k_cw, k_cb = jax.random.split(key, 5)

        # nn.Embedding(len(vocab), vector_dim, padding_idx=0): row 0 is zero.
        emb = jax.random.normal(k_emb, (vocab_size, vector_dim), jnp.float32) * 0.1
        self.embedding = emb.at[0].set(0.0)

        # nn.RNN(vector_dim, hidden_size, bias=False): W_ih (H, D), W_hh (H, H)
        bound = 1.0 / jnp.sqrt(hidden_size)
        self.w_ih = jax.random.uniform(k_ih, (hidden_size, vector_dim),
                                       jnp.float32, -bound, bound)
        self.w_hh = jax.random.uniform(k_hh, (hidden_size, hidden_size),
                                       jnp.float32, -bound, bound)

        # nn.Linear(hidden_size, 6): W (6, H), b (6,)
        self.w_cls = jax.random.uniform(k_cw, (num_classes, hidden_size),
                                        jnp.float32, -bound, bound)
        self.b_cls = jax.random.uniform(k_cb, (num_classes,),
                                        jnp.float32, -bound, bound)
        self.num_classes = num_classes

        # ---- Kernel-facing parameters, prepared ONCE (no per-call transposes/casts) ----
        # Embedding folded into the input projection: emb_proj[v] = embedding[v] @ W_ih^T.
        # Row 0 stays zero (padding_idx), and the in-kernel input matmul disappears.
        self.emb_proj = jnp.dot(self.embedding, self.w_ih.T).astype(jnp.bfloat16)   # (V, H)
        self.w_hh_t = self.w_hh.T.astype(jnp.bfloat16)                              # (H, H)
        # Classifier: bf16 MXU inputs with f32 accumulation; columns zero-padded to 128
        # lanes so the kernel's output store is an unmasked lane-dense vst.
        wc = jnp.zeros((hidden_size, _LANES), jnp.float32)
        wc = wc.at[:, :num_classes].set(self.w_cls.T)
        self.w_cls_pad = wc.astype(jnp.bfloat16)                                    # (H, 128)
        self.b_cls_pad = jnp.zeros((1, _LANES), jnp.float32).at[:, :num_classes].set(self.b_cls)

    def __call__(self, x_tokens, y=None):
        # Gather of the folded projection, directly into time-major (S, B, H):
        # transpose the tiny int token matrix, not float activations.
        pre_x_tm = jnp.take(self.emb_proj, x_tokens.T, axis=0)       # (S, B, H) bf16

        logits = rnn_classify_pallas(
            pre_x_tm, self.w_hh_t, self.w_cls_pad, self.b_cls_pad)
        logits = logits[:, :self.num_classes]                        # (B, 6)

        if y is not None:
            # cross_entropy (mean reduction) on logits, plain-JAX glue.
            logp = jax.nn.log_softmax(logits, axis=-1)
            return -jnp.mean(jnp.take_along_axis(logp, y[:, None], axis=-1))
        return logits


if __name__ == "__main__":
    B, S = 16, 8          # batch, sequence length
    VOCAB = 30            # len(vocab)
    D, H = 32, 32         # vector_dim, hidden_size

    key = jax.random.PRNGKey(0)
    k_tok, k_lbl, k_mod = jax.random.split(key, 3)

    model = MultiClassRNNModelPallas(D, VOCAB, H, key=k_mod)

    x_tokens = jax.random.randint(k_tok, (B, S), 0, VOCAB, dtype=jnp.int32)
    y_labels = jax.random.randint(k_lbl, (B,), 0, 6, dtype=jnp.int32)

    # inference path (y=None) -> logits (B, 6)
    logits = jax.block_until_ready(model(x_tokens))
    assert logits.shape == (B, 6)

    # training path (with y) -> scalar cross-entropy loss
    loss = jax.block_until_ready(model(x_tokens, y_labels))
    assert loss.shape == ()

    # 1) bf16-matched pure-JAX reference (same fold/casts as the kernel) -> tight check
    def ref_forward_bf16(tokens):
        pre = jnp.take(model.emb_proj, tokens, axis=0)               # (B, S, H) bf16
        h = jnp.zeros((tokens.shape[0], H), jnp.float32)
        for t in range(S):
            rec = jnp.dot(h.astype(jnp.bfloat16), model.w_hh_t,
                          preferred_element_type=jnp.float32)
            h = jnp.tanh(pre[:, t, :].astype(jnp.float32) + rec)
        out = jnp.dot(h.astype(jnp.bfloat16), model.w_cls_pad,
                      preferred_element_type=jnp.float32) + model.b_cls_pad
        return out[:, :6]

    # 2) full-f32 reference (the PyTorch math) -> loose check (bf16 MXU inputs in kernel)
    def ref_forward_f32(tokens):
        x = jnp.take(model.embedding, tokens, axis=0)                # (B, S, D) f32
        h = jnp.zeros((tokens.shape[0], H), jnp.float32)
        for t in range(S):
            h = jnp.tanh(x[:, t, :] @ model.w_ih.T + h @ model.w_hh.T)
        return h @ model.w_cls.T + model.b_cls

    ref_bf16 = ref_forward_bf16(x_tokens)
    ref_f32 = ref_forward_f32(x_tokens)
    assert jnp.allclose(logits, ref_bf16, atol=2e-3, rtol=2e-3), \
        float(jnp.max(jnp.abs(logits - ref_bf16)))
    assert jnp.allclose(logits, ref_f32, atol=5e-2, rtol=0.0), \
        float(jnp.max(jnp.abs(logits - ref_f32)))

    # Ragged batch (exercises pad-instead-of-assert path: B=12 -> padded to 16, sliced back)
    logits_ragged = jax.block_until_ready(model(x_tokens[:12]))
    assert logits_ragged.shape == (12, 6)
    assert jnp.allclose(logits_ragged, logits[:12], atol=1e-5, rtol=1e-5)

    print("KERNEL_OK")
</pallas_src>

<mosaic_0001>
module attributes {stable_mosaic.version = 11 : i64} {
  func.func @_rnn_classify_kernel(%arg0: i32, %arg1: memref<8x16x32xbf16, #tpu.memory_space<vmem>>, %arg2: memref<32x32xbf16, #tpu.memory_space<vmem>>, %arg3: memref<32x128xbf16, #tpu.memory_space<vmem>>, %arg4: memref<1x128xf32, #tpu.memory_space<vmem>>, %arg5: memref<16x128xf32, #tpu.memory_space<vmem>>) attributes {dimension_semantics = [#tpu.dimension_semantics<parallel>], iteration_bounds = array<i64: 1>, scalar_prefetch = 0 : i64, scratch_operands = 0 : i64, tpu.core_type = #tpu.core_type<tc>, window_params = [{transform_indices = @transform_0, window_bounds = array<i64: 8, 16, 32>}, {pipeline_mode = #tpu.pipeline_mode<synchronous>, transform_indices = @transform_1, window_bounds = array<i64: 32, 32>}, {pipeline_mode = #tpu.pipeline_mode<synchronous>, transform_indices = @transform_2, window_bounds = array<i64: 32, 128>}, {pipeline_mode = #tpu.pipeline_mode<synchronous>, transform_indices = @transform_3, window_bounds = array<i64: 1, 128>}, {transform_indices = @transform_4, window_bounds = array<i64: 16, 128>}]} {
    %c0 = arith.constant 0 : index
    %c0_0 = arith.constant 0 : index
    %0 = vector.load %arg2[%c0, %c0_0] : memref<32x32xbf16, #tpu.memory_space<vmem>>, vector<32x32xbf16>
    %c0_1 = arith.constant 0 : index
    %c0_2 = arith.constant 0 : index
    %1 = vector.load %arg3[%c0_1, %c0_2] : memref<32x128xbf16, #tpu.memory_space<vmem>>, vector<32x128xbf16>
    %c0_3 = arith.constant 0 : index
    %c0_4 = arith.constant 0 : index
    %2 = vector.load %arg4[%c0_3, %c0_4] : memref<1x128xf32, #tpu.memory_space<vmem>>, vector<1x128xf32>
    %cst = arith.constant 0.000000e+00 : f32
    %3 = vector.broadcast %cst : f32 to vector<8x32xf32>
    %cst_5 = arith.constant 0.000000e+00 : f32
    %4 = vector.broadcast %cst_5 : f32 to vector<8x32xf32>
    %c0_6 = arith.constant 0 : index
    %c0_7 = arith.constant 0 : index
    %c0_8 = arith.constant 0 : index
    %5 = vector.load %arg1[%c0_6, %c0_7, %c0_8] : memref<8x16x32xbf16, #tpu.memory_space<vmem>>, vector<1x8x32xbf16>
    %6 = vector.shape_cast %5 : vector<1x8x32xbf16> to vector<8x32xbf16>
    %7 = arith.extf %6 : vector<8x32xbf16> to vector<8x32xf32>
    %8 = arith.truncf %3 : vector<8x32xf32> to vector<8x32xbf16>
    %cst_9 = arith.constant dense<0.000000e+00> : vector<8x32xf32>
    %9 = tpu.matmul %8, %0, %cst_9 {dimension_numbers = #tpu.dot_dimension_numbers<[1], [0], [0], [1], [0, 0, 1, 1], [], []>} : vector<8x32xbf16>, vector<32x32xbf16>, vector<8x32xf32> -> vector<8x32xf32>
    %10 = arith.addf %7, %9 : vector<8x32xf32>
    %11 = math.tanh %10 : vector<8x32xf32>
    %c0_10 = arith.constant 0 : index
    %c8 = arith.constant 8 : index
    %c0_11 = arith.constant 0 : index
    %12 = vector.load %arg1[%c0_10, %c8, %c0_11] : memref<8x16x32xbf16, #tpu.memory_space<vmem>>, vector<1x8x32xbf16>
    %13 = vector.shape_cast %12 : vector<1x8x32xbf16> to vector<8x32xbf16>
    %14 = arith.extf %13 : vector<8x32xbf16> to vector<8x32xf32>
    %15 = arith.truncf %4 : vector<8x32xf32> to vector<8x32xbf16>
    %cst_12 = arith.constant dense<0.000000e+00> : vector<8x32xf32>
    %16 = tpu.matmul %15, %0, %cst_12 {dimension_numbers = #tpu.dot_dimension_numbers<[1], [0], [0], [1], [0, 0, 1, 1], [], []>} : vector<8x32xbf16>, vector<32x32xbf16>, vector<8x32xf32> -> vector<8x32xf32>
    %17 = arith.addf %14, %16 : vector<8x32xf32>
    %18 = math.tanh %17 : vector<8x32xf32>
    %c1 = arith.constant 1 : index
    %c0_13 = arith.constant 0 : index
    %c0_14 = arith.constant 0 : index
    %19 = vector.load %arg1[%c1, %c0_13, %c0_14] : memref<8x16x32xbf16, #tpu.memory_space<vmem>>, vector<1x8x32xbf16>
    %20 = vector.shape_cast %19 : vector<1x8x32xbf16> to vector<8x32xbf16>
    %21 = arith.extf %20 : vector<8x32xbf16> to vector<8x32xf32>
    %22 = arith.truncf %11 : vector<8x32xf32> to vector<8x32xbf16>
    %cst_15 = arith.constant dense<0.000000e+00> : vector<8x32xf32>
    %23 = tpu.matmul %22, %0, %cst_15 {dimension_numbers = #tpu.dot_dimension_numbers<[1], [0], [0], [1], [0, 0, 1, 1], [], []>} : vector<8x32xbf16>, vector<32x32xbf16>, vector<8x32xf32> -> vector<8x32xf32>
    %24 = arith.addf %21, %23 : vector<8x32xf32>
    %25 = math.tanh %24 : vector<8x32xf32>
    %c1_16 = arith.constant 1 : index
    %c8_17 = arith.constant 8 : index
    %c0_18 = arith.constant 0 : index
    %26 = vector.load %arg1[%c1_16, %c8_17, %c0_18] : memref<8x16x32xbf16, #tpu.memory_space<vmem>>, vector<1x8x32xbf16>
    %27 = vector.shape_cast %26 : vector<1x8x32xbf16> to vector<8x32xbf16>
    %28 = arith.extf %27 : vector<8x32xbf16> to vector<8x32xf32>
    %29 = arith.truncf %18 : vector<8x32xf32> to vector<8x32xbf16>
    %cst_19 = arith.constant dense<0.000000e+00> : vector<8x32xf32>
    %30 = tpu.matmul %29, %0, %cst_19 {dimension_numbers = #tpu.dot_dimension_numbers<[1], [0], [0], [1], [0, 0, 1, 1], [], []>} : vector<8x32xbf16>, vector<32x32xbf16>, vector<8x32xf32> -> vector<8x32xf32>
    %31 = arith.addf %28, %30 : vector<8x32xf32>
    %32 = math.tanh %31 : vector<8x32xf32>
    %c2 = arith.constant 2 : index
    %c0_20 = arith.constant 0 : index
    %c0_21 = arith.constant 0 : index
    %33 = vector.load %arg1[%c2, %c0_20, %c0_21] : memref<8x16x32xbf16, #tpu.memory_space<vmem>>, vector<1x8x32xbf16>
    %34 = vector.shape_cast %33 : vector<1x8x32xbf16> to vector<8x32xbf16>
    %35 = arith.extf %34 : vector<8x32xbf16> to vector<8x32xf32>
    %36 = arith.truncf %25 : vector<8x32xf32> to vector<8x32xbf16>
    %cst_22 = arith.constant dense<0.000000e+00> : vector<8x32xf32>
    %37 = tpu.matmul %36, %0, %cst_22 {dimension_numbers = #tpu.dot_dimension_numbers<[1], [0], [0], [1], [0, 0, 1, 1], [], []>} : vector<8x32xbf16>, vector<32x32xbf16>, vector<8x32xf32> -> vector<8x32xf32>
    %38 = arith.addf %35, %37 : vector<8x32xf32>
    %39 = math.tanh %38 : vector<8x32xf32>
    %c2_23 = arith.constant 2 : index
    %c8_24 = arith.constant 8 : index
    %c0_25 = arith.constant 0 : index
    %40 = vector.load %arg1[%c2_23, %c8_24, %c0_25] : memref<8x16x32xbf16, #tpu.memory_space<vmem>>, vector<1x8x32xbf16>
    %41 = vector.shape_cast %40 : vector<1x8x32xbf16> to vector<8x32xbf16>
    %42 = arith.extf %41 : vector<8x32xbf16> to vector<8x32xf32>
    %43 = arith.truncf %32 : vector<8x32xf32> to vector<8x32xbf16>
    %cst_26 = arith.constant dense<0.000000e+00> : vector<8x32xf32>
    %44 = tpu.matmul %43, %0, %cst_26 {dimension_numbers = #tpu.dot_dimension_numbers<[1], [0], [0], [1], [0, 0, 1, 1], [], []>} : vector<8x32xbf16>, vector<32x32xbf16>, vector<8x32xf32> -> vector<8x32xf32>
    %45 = arith.addf %42, %44 : vector<8x32xf32>
    %46 = math.tanh %45 : vector<8x32xf32>
    %c3 = arith.constant 3 : index
    %c0_27 = arith.constant 0 : index
    %c0_28 = arith.constant 0 : index
    %47 = vector.load %arg1[%c3, %c0_27, %c0_28] : memref<8x16x32xbf16, #tpu.memory_space<vmem>>, vector<1x8x32xbf16>
    %48 = vector.shape_cast %47 : vector<1x8x32xbf16> to vector<8x32xbf16>
    %49 = arith.extf %48 : vector<8x32xbf16> to vector<8x32xf32>
    %50 = arith.truncf %39 : vector<8x32xf32> to vector<8x32xbf16>
    %cst_29 = arith.constant dense<0.000000e+00> : vector<8x32xf32>
    %51 = tpu.matmul %50, %0, %cst_29 {dimension_numbers = #tpu.dot_dimension_numbers<[1], [0], [0], [1], [0, 0, 1, 1], [], []>} : vector<8x32xbf16>, vector<32x32xbf16>, vector<8x32xf32> -> vector<8x32xf32>
    %52 = arith.addf %49, %51 : vector<8x32xf32>
    %53 = math.tanh %52 : vector<8x32xf32>
    %c3_30 = arith.constant 3 : index
    %c8_31 = arith.constant 8 : index
    %c0_32 = arith.constant 0 : index
    %54 = vector.load %arg1[%c3_30, %c8_31, %c0_32] : memref<8x16x32xbf16, #tpu.memory_space<vmem>>, vector<1x8x32xbf16>
    %55 = vector.shape_cast %54 : vector<1x8x32xbf16> to vector<8x32xbf16>
    %56 = arith.extf %55 : vector<8x32xbf16> to vector<8x32xf32>
    %57 = arith.truncf %46 : vector<8x32xf32> to vector<8x32xbf16>
    %cst_33 = arith.constant dense<0.000000e+00> : vector<8x32xf32>
    %58 = tpu.matmul %57, %0, %cst_33 {dimension_numbers = #tpu.dot_dimension_numbers<[1], [0], [0], [1], [0, 0, 1, 1], [], []>} : vector<8x32xbf16>, vector<32x32xbf16>, vector<8x32xf32> -> vector<8x32xf32>
    %59 = arith.addf %56, %58 : vector<8x32xf32>
    %60 = math.tanh %59 : vector<8x32xf32>
    %c4 = arith.constant 4 : index
    %c0_34 = arith.constant 0 : index
    %c0_35 = arith.constant 0 : index
    %61 = vector.load %arg1[%c4, %c0_34, %c0_35] : memref<8x16x32xbf16, #tpu.memory_space<vmem>>, vector<1x8x32xbf16>
    %62 = vector.shape_cast %61 : vector<1x8x32xbf16> to vector<8x32xbf16>
    %63 = arith.extf %62 : vector<8x32xbf16> to vector<8x32xf32>
    %64 = arith.truncf %53 : vector<8x32xf32> to vector<8x32xbf16>
    %cst_36 = arith.constant dense<0.000000e+00> : vector<8x32xf32>
    %65 = tpu.matmul %64, %0, %cst_36 {dimension_numbers = #tpu.dot_dimension_numbers<[1], [0], [0], [1], [0, 0, 1, 1], [], []>} : vector<8x32xbf16>, vector<32x32xbf16>, vector<8x32xf32> -> vector<8x32xf32>
    %66 = arith.addf %63, %65 : vector<8x32xf32>
    %67 = math.tanh %66 : vector<8x32xf32>
    %c4_37 = arith.constant 4 : index
    %c8_38 = arith.constant 8 : index
    %c0_39 = arith.constant 0 : index
    %68 = vector.load %arg1[%c4_37, %c8_38, %c0_39] : memref<8x16x32xbf16, #tpu.memory_space<vmem>>, vector<1x8x32xbf16>
    %69 = vector.shape_cast %68 : vector<1x8x32xbf16> to vector<8x32xbf16>
    %70 = arith.extf %69 : vector<8x32xbf16> to vector<8x32xf32>
    %71 = arith.truncf %60 : vector<8x32xf32> to vector<8x32xbf16>
    %cst_40 = arith.constant dense<0.000000e+00> : vector<8x32xf32>
    %72 = tpu.matmul %71, %0, %cst_40 {dimension_numbers = #tpu.dot_dimension_numbers<[1], [0], [0], [1], [0, 0, 1, 1], [], []>} : vector<8x32xbf16>, vector<32x32xbf16>, vector<8x32xf32> -> vector<8x32xf32>
    %73 = arith.addf %70, %72 : vector<8x32xf32>
    %74 = math.tanh %73 : vector<8x32xf32>
    %c5 = arith.constant 5 : index
    %c0_41 = arith.constant 0 : index
    %c0_42 = arith.constant 0 : index
    %75 = vector.load %arg1[%c5, %c0_41, %c0_42] : memref<8x16x32xbf16, #tpu.memory_space<vmem>>, vector<1x8x32xbf16>
    %76 = vector.shape_cast %75 : vector<1x8x32xbf16> to vector<8x32xbf16>
    %77 = arith.extf %76 : vector<8x32xbf16> to vector<8x32xf32>
    %78 = arith.truncf %67 : vector<8x32xf32> to vector<8x32xbf16>
    %cst_43 = arith.constant dense<0.000000e+00> : vector<8x32xf32>
    %79 = tpu.matmul %78, %0, %cst_43 {dimension_numbers = #tpu.dot_dimension_numbers<[1], [0], [0], [1], [0, 0, 1, 1], [], []>} : vector<8x32xbf16>, vector<32x32xbf16>, vector<8x32xf32> -> vector<8x32xf32>
    %80 = arith.addf %77, %79 : vector<8x32xf32>
    %81 = math.tanh %80 : vector<8x32xf32>
    %c5_44 = arith.constant 5 : index
    %c8_45 = arith.constant 8 : index
    %c0_46 = arith.constant 0 : index
    %82 = vector.load %arg1[%c5_44, %c8_45, %c0_46] : memref<8x16x32xbf16, #tpu.memory_space<vmem>>, vector<1x8x32xbf16>
    %83 = vector.shape_cast %82 : vector<1x8x32xbf16> to vector<8x32xbf16>
    %84 = arith.extf %83 : vector<8x32xbf16> to vector<8x32xf32>
    %85 = arith.truncf %74 : vector<8x32xf32> to vector<8x32xbf16>
    %cst_47 = arith.constant dense<0.000000e+00> : vector<8x32xf32>
    %86 = tpu.matmul %85, %0, %cst_47 {dimension_numbers = #tpu.dot_dimension_numbers<[1], [0], [0], [1], [0, 0, 1, 1], [], []>} : vector<8x32xbf16>, vector<32x32xbf16>, vector<8x32xf32> -> vector<8x32xf32>
    %87 = arith.addf %84, %86 : vector<8x32xf32>
    %88 = math.tanh %87 : vector<8x32xf32>
    %c6 = arith.constant 6 : index
    %c0_48 = arith.constant 0 : index
    %c0_49 = arith.constant 0 : index
    %89 = vector.load %arg1[%c6, %c0_48, %c0_49] : memref<8x16x32xbf16, #tpu.memory_space<vmem>>, vector<1x8x32xbf16>
    %90 = vector.shape_cast %89 : vector<1x8x32xbf16> to vector<8x32xbf16>
    %91 = arith.extf %90 : vector<8x32xbf16> to vector<8x32xf32>
    %92 = arith.truncf %81 : vector<8x32xf32> to vector<8x32xbf16>
    %cst_50 = arith.constant dense<0.000000e+00> : vector<8x32xf32>
    %93 = tpu.matmul %92, %0, %cst_50 {dimension_numbers = #tpu.dot_dimension_numbers<[1], [0], [0], [1], [0, 0, 1, 1], [], []>} : vector<8x32xbf16>, vector<32x32xbf16>, vector<8x32xf32> -> vector<8x32xf32>
    %94 = arith.addf %91, %93 : vector<8x32xf32>
    %95 = math.tanh %94 : vector<8x32xf32>
    %c6_51 = arith.constant 6 : index
    %c8_52 = arith.constant 8 : index
    %c0_53 = arith.constant 0 : index
    %96 = vector.load %arg1[%c6_51, %c8_52, %c0_53] : memref<8x16x32xbf16, #tpu.memory_space<vmem>>, vector<1x8x32xbf16>
    %97 = vector.shape_cast %96 : vector<1x8x32xbf16> to vector<8x32xbf16>
    %98 = arith.extf %97 : vector<8x32xbf16> to vector<8x32xf32>
    %99 = arith.truncf %88 : vector<8x32xf32> to vector<8x32xbf16>
    %cst_54 = arith.constant dense<0.000000e+00> : vector<8x32xf32>
    %100 = tpu.matmul %99, %0, %cst_54 {dimension_numbers = #tpu.dot_dimension_numbers<[1], [0], [0], [1], [0, 0, 1, 1], [], []>} : vector<8x32xbf16>, vector<32x32xbf16>, vector<8x32xf32> -> vector<8x32xf32>
    %101 = arith.addf %98, %100 : vector<8x32xf32>
    %102 = math.tanh %101 : vector<8x32xf32>
    %c7 = arith.constant 7 : index
    %c0_55 = arith.constant 0 : index
    %c0_56 = arith.constant 0 : index
    %103 = vector.load %arg1[%c7, %c0_55, %c0_56] : memref<8x16x32xbf16, #tpu.memory_space<vmem>>, vector<1x8x32xbf16>
    %104 = vector.shape_cast %103 : vector<1x8x32xbf16> to vector<8x32xbf16>
    %105 = arith.extf %104 : vector<8x32xbf16> to vector<8x32xf32>
    %106 = arith.truncf %95 : vector<8x32xf32> to vector<8x32xbf16>
    %cst_57 = arith.constant dense<0.000000e+00> : vector<8x32xf32>
    %107 = tpu.matmul %106, %0, %cst_57 {dimension_numbers = #tpu.dot_dimension_numbers<[1], [0], [0], [1], [0, 0, 1, 1], [], []>} : vector<8x32xbf16>, vector<32x32xbf16>, vector<8x32xf32> -> vector<8x32xf32>
    %108 = arith.addf %105, %107 : vector<8x32xf32>
    %109 = math.tanh %108 : vector<8x32xf32>
    %c7_58 = arith.constant 7 : index
    %c8_59 = arith.constant 8 : index
    %c0_60 = arith.constant 0 : index
    %110 = vector.load %arg1[%c7_58, %c8_59, %c0_60] : memref<8x16x32xbf16, #tpu.memory_space<vmem>>, vector<1x8x32xbf16>
    %111 = vector.shape_cast %110 : vector<1x8x32xbf16> to vector<8x32xbf16>
    %112 = arith.extf %111 : vector<8x32xbf16> to vector<8x32xf32>
    %113 = arith.truncf %102 : vector<8x32xf32> to vector<8x32xbf16>
    %cst_61 = arith.constant dense<0.000000e+00> : vector<8x32xf32>
    %114 = tpu.matmul %113, %0, %cst_61 {dimension_numbers = #tpu.dot_dimension_numbers<[1], [0], [0], [1], [0, 0, 1, 1], [], []>} : vector<8x32xbf16>, vector<32x32xbf16>, vector<8x32xf32> -> vector<8x32xf32>
    %115 = arith.addf %112, %114 : vector<8x32xf32>
    %116 = math.tanh %115 : vector<8x32xf32>
    %117 = arith.truncf %109 : vector<8x32xf32> to vector<8x32xbf16>
    %cst_62 = arith.constant dense<0.000000e+00> : vector<8x128xf32>
    %118 = tpu.matmul %117, %1, %cst_62 {dimension_numbers = #tpu.dot_dimension_numbers<[1], [0], [0], [1], [0, 0, 1, 1], [], []>} : vector<8x32xbf16>, vector<32x128xbf16>, vector<8x128xf32> -> vector<8x128xf32>
    %119 = vector.broadcast %2 : vector<1x128xf32> to vector<8x128xf32>
    %120 = arith.addf %118, %119 : vector<8x128xf32>
    %c0_63 = arith.constant 0 : index
    %c0_64 = arith.constant 0 : index
    %121 = vector.load %arg5[%c0_63, %c0_64] : memref<16x128xf32, #tpu.memory_space<vmem>>, vector<8x128xf32>
    tpu.vector_store %arg5[%c0_63, %c0_64], %120 {strides = array<i32>} : memref<16x128xf32, #tpu.memory_space<vmem>>, vector<8x128xf32>,
    %122 = arith.truncf %116 : vector<8x32xf32> to vector<8x32xbf16>
    %cst_65 = arith.constant dense<0.000000e+00> : vector<8x128xf32>
    %123 = tpu.matmul %122, %1, %cst_65 {dimension_numbers = #tpu.dot_dimension_numbers<[1], [0], [0], [1], [0, 0, 1, 1], [], []>} : vector<8x32xbf16>, vector<32x128xbf16>, vector<8x128xf32> -> vector<8x128xf32>
    %124 = vector.broadcast %2 : vector<1x128xf32> to vector<8x128xf32>
    %125 = arith.addf %123, %124 : vector<8x128xf32>
    %c8_66 = arith.constant 8 : index
    %c0_67 = arith.constant 0 : index
    %126 = vector.load %arg5[%c8_66, %c0_67] : memref<16x128xf32, #tpu.memory_space<vmem>>, vector<8x128xf32>
    tpu.vector_store %arg5[%c8_66, %c0_67], %125 {strides = array<i32>} : memref<16x128xf32, #tpu.memory_space<vmem>>, vector<8x128xf32>,
    return
  }
  func.func @transform_0(%arg0: i32) -> (i32, i32, i32) {
    %c0_i32 = arith.constant 0 : i32
    %c0_i32_0 = arith.constant 0 : i32
    %c0_i32_1 = arith.constant 0 : i32
    return %c0_i32, %arg0, %c0_i32_0 : i32, i32, i32
  }
  func.func @transform_1(%arg0: i32) -> (i32, i32) {
    %c0_i32 = arith.constant 0 : i32
    %c0_i32_0 = arith.constant 0 : i32
    %c0_i32_1 = arith.constant 0 : i32
    return %c0_i32, %c0_i32_0 : i32, i32
  }
  func.func @transform_2(%arg0: i32) -> (i32, i32) {
    %c0_i32 = arith.constant 0 : i32
    %c0_i32_0 = arith.constant 0 : i32
    %c0_i32_1 = arith.constant 0 : i32
    return %c0_i32, %c0_i32_0 : i32, i32
  }
  func.func @transform_3(%arg0: i32) -> (i32, i32) {
    %c0_i32 = arith.constant 0 : i32
    %c0_i32_0 = arith.constant 0 : i32
    %c0_i32_1 = arith.constant 0 : i32
    return %c0_i32, %c0_i32_0 : i32, i32
  }
  func.func @transform_4(%arg0: i32) -> (i32, i32) {
    %c0_i32 = arith.constant 0 : i32
    %c0_i32_0 = arith.constant 0 : i32
    return %arg0, %c0_i32 : i32, i32
  }
}

</mosaic_0001>

<llo_original>
// kernel: tpu_custom_call.1
$region0: #{tpu_custom_call.1}
  #allocation0 [shape = 'u32[]', space=smem, size = 0x4, offset = 0x4, fixed_abs, tag = 'smem constant byte address 0x4 - core index']
  #allocation1 [shape = 'u32[144,128]{1,0:T(1,128)}', space=vmem, size = 0x12000, scoped, tag = 'internal scratch']
  %s0 = inlined_call_operand.hbm [shape: bf16[8,16,32], index: 0, kind: input, shape index: {}]
  %s1 = inlined_call_operand.hbm [shape: bf16[32,32], index: 1, kind: input, shape index: {}]
  %s2 = inlined_call_operand.hbm [shape: bf16[32,128], index: 2, kind: input, shape index: {}]
  %s3 = inlined_call_operand.vmem [shape: f32[1,128], index: 3, kind: input, shape index: {}]
  %s4 = inlined_call_operand.hbm [shape: f32[16,128], index: 4, kind: output, shape index: {}]
  %s5 = sld [smem:[#allocation0]]
  $region38: #{tpu_custom_call.1} parent=0
    _
  %s7 = ssub.s32 1, %s5
  %s8 = scalar_select 0, %s7, %s5
  $region1: #{tpu_custom_call.1} parent=0
    #allocation2 [shape = 'u8[32768]{0}', space=vmem, size = 0x8000, scoped, tag = 'input window, operand 0, single buffered']
    #allocation3 [shape = 's32[1]{0}', space=sflag, size = 0x4, scoped, tag = 'scoped memory for tpu_custom_call.1']
    #allocation4 [shape = 's32[1]{0}', space=sflag, size = 0x4, scoped, tag = 'scoped memory for tpu_custom_call.1']
    #allocation5 [shape = 'u8[8192]{0}', space=vmem, size = 0x2000, scoped, tag = 'input window, operand 1, single buffered']
    #allocation6 [shape = 's32[1]{0}', space=sflag, size = 0x4, scoped, tag = 'scoped memory for tpu_custom_call.1']
    #allocation7 [shape = 'u8[8192]{0}', space=vmem, size = 0x2000, scoped, tag = 'input window, operand 2, single buffered']
    #allocation8 [shape = 'u8[8192]{0}', space=vmem, size = 0x2000, scoped, tag = 'output window, operand 0, single buffered']
    %9 = vsyncpa [#allocation3], 0
    %10 = vsyncpa [#allocation6], 0
    %11 = vsyncpa [#allocation4], 0
    // Predicated region
    $region2: #{tpu_custom_call.1} parent=1 // pred_check
      _
    $region3: #{tpu_custom_call.1} parent=1 // pred_check_branch
      %13 = sbr.rel (0) target = $region5
    $region4: #{tpu_custom_call.1} parent=1 // pred_region
      %s15 = ssub.s32 1024, 1024
      %16 = vsyncadd [#allocation3], %s15
      %s17 = sshll.u32 [#allocation2], 4
      %s18 = int_to_ptr.vmem [resolvable:$true] %s17
      %23 = dma.hbm_to_vmem [thread:$0]  %s0, 1024, %s18, [#allocation3], 64, 64, 4
    $region5: #{tpu_custom_call.1} parent=1 // pred_fallthru
      _
    // Predicated region
    $region6: #{tpu_custom_call.1} parent=1 // pred_check
      _
    $region7: #{tpu_custom_call.1} parent=1 // pred_check_branch
      %25 = sbr.rel (0) target = $region9
    $region8: #{tpu_custom_call.1} parent=1 // pred_region
      %s27 = ssub.s32 256, 256
      %28 = vsyncadd [#allocation6], %s27
      %s29 = sshll.u32 [#allocation5], 4
      %s30 = int_to_ptr.vmem [resolvable:$true] %s29
      %35 = dma.hbm_to_vmem [thread:$0]  %s1, 256, %s30, [#allocation6], 64, 64, 4
    $region9: #{tpu_custom_call.1} parent=1 // pred_fallthru
      _
    // Predicated region
    $region10: #{tpu_custom_call.1} parent=1 // pred_check
      _
    $region11: #{tpu_custom_call.1} parent=1 // pred_check_branch
      %37 = sbr.rel (0) target = $region13
    $region12: #{tpu_custom_call.1} parent=1 // pred_region
      %s39 = ssub.s32 256, 256
      %40 = vsyncadd [#allocation6], %s39
      %s41 = sshll.u32 [#allocation7], 4
      %s42 = int_to_ptr.vmem [resolvable:$true] %s41
      %47 = dma.hbm_to_vmem [thread:$0]  %s2, 256, %s42, [#allocation6], 64, 64, 4
    $region13: #{tpu_custom_call.1} parent=1 // pred_fallthru
      _
    // Predicated region
    $region14: #{tpu_custom_call.1} parent=1 // pred_check
      _
    $region15: #{tpu_custom_call.1} parent=1 // pred_check_branch
      %49 = sbr.rel (0) target = $region17
    $region16: #{tpu_custom_call.1} parent=1 // pred_region
      _
    $region17: #{tpu_custom_call.1} parent=1 // pred_fallthru
      _
    // Predicated region
    $region18: #{tpu_custom_call.1} parent=1 // pred_check
      _
    $region19: #{tpu_custom_call.1} parent=1 // pred_check_branch
      %51 = sbr.rel (0) target = $region21
    $region20: #{tpu_custom_call.1} parent=1 // pred_region
      %52 = dma.done [#allocation3], 1024
    $region21: #{tpu_custom_call.1} parent=1 // pred_fallthru
      _
    // Predicated region
    $region22: #{tpu_custom_call.1} parent=1 // pred_check
      _
    $region23: #{tpu_custom_call.1} parent=1 // pred_check_branch
      %54 = sbr.rel (0) target = $region25
    $region24: #{tpu_custom_call.1} parent=1 // pred_region
      %55 = dma.done [#allocation6], 256
    $region25: #{tpu_custom_call.1} parent=1 // pred_fallthru
      _
    // Predicated region
    $region26: #{tpu_custom_call.1} parent=1 // pred_check
      _
    $region27: #{tpu_custom_call.1} parent=1 // pred_check_branch
      %57 = sbr.rel (0) target = $region29
    $region28: #{tpu_custom_call.1} parent=1 // pred_region
      %58 = dma.done [#allocation6], 256
    $region29: #{tpu_custom_call.1} parent=1 // pred_fallthru
      _
    %v60 = vld [vmem:[#allocation5] sm:$0xf]
    %v61 = vld [vmem:[#allocation5 + $0x4] sm:$0xf]
    %v62 = vld [vmem:[#allocation5 + $0x8] sm:$0xf]
    %v63 = vld [vmem:[#allocation5 + $0xc] sm:$0xf]
    %v64 = vld [vmem:[#allocation7] sm:$0xf]
    %v65 = vld [vmem:[#allocation7 + $0x4] sm:$0xf]
    %v66 = vld [vmem:[#allocation7 + $0x8] sm:$0xf]
    %v67 = vld [vmem:[#allocation7 + $0xc] sm:$0xf]
    %v68 = vld [vmem:[%s3] sm:$0x1]
    %v69 = vld [vmem:[#allocation2] sm:$0xf]
    %v70 = vunpack.c.l.bf16 %v69
    %v75 = vunpack.c.l.b16 %v60
    %v76 = vunpack.c.l.b16 %v61
    %v77 = vunpack.c.l.b16 %v62
    %v78 = vunpack.c.l.b16 %v63
    %v79 = vpack.c.b16 %v76, %v75
    %v80 = vpack.c.b16 %v78, %v77
    %vm83 = vcmask 261120
    %v85 = vsel %vm83, 0, 0
    %87 = vmatprep.subr.bf16.mxu0 0
    %88 = vmatpush1.bf16.msra.mxu0 %v79
    %89 = vmatprep.subr.bf16.mxu0 0
    %90 = vmatpush1.bf16.msra.mxu0 %v80
    %91 = vmatprep.subr.bf16.mxu0 0
    %92 = vmatpush1.bf16.msra.mxu0 0
    %93 = vmatprep.subr.bf16.mxu0 0
    %94 = vmatpush1.bf16.msra.mxu0 0
    %95 = vmatprep.subr.bf16.mxu0 0
    %96 = vmatpush1.bf16.msra.mxu0 0
    %97 = vmatprep.subr.bf16.mxu0 0
    %98 = vmatpush1.bf16.msra.mxu0 0
    %99 = vmatprep.subr.bf16.mxu0 0
    %100 = vmatpush1.bf16.msra.mxu0 0
    %101 = vmatprep.subr.bf16.mxu0 0
    %102 = vmatpush1.bf16.msra.mxu0 0
    %103 = vmatprep.subr.bf16.mxu0 0
    %104 = vmatpush1.bf16.msra.mxu0 0
    %105 = vmatprep.subr.bf16.mxu0 0
    %106 = vmatpush1.bf16.msra.mxu0 0
    %107 = vmatprep.subr.bf16.mxu0 0
    %108 = vmatpush1.bf16.msra.mxu0 0
    %109 = vmatprep.subr.bf16.mxu0 0
    %110 = vmatpush1.bf16.msra.mxu0 0
    %111 = vmatprep.subr.bf16.mxu0 0
    %112 = vmatpush1.bf16.msra.mxu0 0
    %113 = vmatprep.subr.bf16.mxu0 0
    %114 = vmatpush1.bf16.msra.mxu0 0
    %115 = vmatprep.subr.bf16.mxu0 0
    %116 = vmatpush1.bf16.msra.mxu0 0
    %117 = vmatprep.subr.bf16.mxu0 0
    %118 = vmatpush1.bf16.msra.mxu0 0
    %119 = vmatprep.mubr.bf16.mxu0 0
    %120 = vmatmul.mubr.bf16.gmra.mrb[0].mxu0 %v85
    %v121 = vpop.f32.mrb[0].mxu0
    %v122 = vadd.f32 0.0, %v121
    %v123 = vpop.f32.mrb[0].mxu0
    %v124 = vpop.f32.mrb[0].mxu0
    %v125 = vpop.f32.mrb[0].mxu0
    %126 = vdwg.mxu0
    %v127 = vadd.f32 %v70, %v122
    %v128 = vtanh.pop %v127
    %v129 = vld [vmem:[#allocation2 + $0x4] sm:$0xf]
    %v130 = vunpack.c.l.bf16 %v129
    %v131 = vadd.f32 %v130, %v122
    %v132 = vtanh.pop %v131
    %s133 = scalar_lea.vmem [#allocation2], 8
    %v134 = vld [vmem:[%s133] sm:$0xf]
    %v135 = vunpack.c.l.bf16 %v134
    %v136 = vpack.c.bf16 %v128, %v128
    %v138 = vsel %vm83, %v136, 0
    %140 = vmatprep.subr.bf16.mxu0 0
    %141 = vmatpush1.bf16.msra.mxu0 %v79
    %142 = vmatprep.subr.bf16.mxu0 0
    %143 = vmatpush1.bf16.msra.mxu0 %v80
    %144 = vmatprep.subr.bf16.mxu0 0
    %145 = vmatpush1.bf16.msra.mxu0 0
    %146 = vmatprep.subr.bf16.mxu0 0
    %147 = vmatpush1.bf16.msra.mxu0 0
    %148 = vmatprep.subr.bf16.mxu0 0
    %149 = vmatpush1.bf16.msra.mxu0 0
    %150 = vmatprep.subr.bf16.mxu0 0
    %151 = vmatpush1.bf16.msra.mxu0 0
    %152 = vmatprep.subr.bf16.mxu0 0
    %153 = vmatpush1.bf16.msra.mxu0 0
    %154 = vmatprep.subr.bf16.mxu0 0
    %155 = vmatpush1.bf16.msra.mxu0 0
    %156 = vmatprep.subr.bf16.mxu0 0
    %157 = vmatpush1.bf16.msra.mxu0 0
    %158 = vmatprep.subr.bf16.mxu0 0
    %159 = vmatpush1.bf16.msra.mxu0 0
    %160 = vmatprep.subr.bf16.mxu0 0
    %161 = vmatpush1.bf16.msra.mxu0 0
    %162 = vmatprep.subr.bf16.mxu0 0
    %163 = vmatpush1.bf16.msra.mxu0 0
    %164 = vmatprep.subr.bf16.mxu0 0
    %165 = vmatpush1.bf16.msra.mxu0 0
    %166 = vmatprep.subr.bf16.mxu0 0
    %167 = vmatpush1.bf16.msra.mxu0 0
    %168 = vmatprep.subr.bf16.mxu0 0
    %169 = vmatpush1.bf16.msra.mxu0 0
    %170 = vmatprep.subr.bf16.mxu0 0
    %171 = vmatpush1.bf16.msra.mxu0 0
    %172 = vmatprep.mubr.bf16.mxu0 0
    %173 = vmatmul.mubr.bf16.gmra.mrb[0].mxu0 %v138
    %v174 = vpop.f32.mrb[0].mxu0
    %v175 = vadd.f32 0.0, %v174
    %v176 = vpop.f32.mrb[0].mxu0
    %v177 = vpop.f32.mrb[0].mxu0
    %v178 = vpop.f32.mrb[0].mxu0
    %179 = vdwg.mxu0
    %v180 = vadd.f32 %v135, %v175
    %v181 = vtanh.pop %v180
    %v182 = vld [vmem:[%s133 + $0x4] sm:$0xf]
    %v183 = vunpack.c.l.bf16 %v182
    %v184 = vpack.c.bf16 %v132, %v132
    %v186 = vsel %vm83, %v184, 0
    %188 = vmatprep.subr.bf16.mxu0 0
    %189 = vmatpush1.bf16.msra.mxu0 %v79
    %190 = vmatprep.subr.bf16.mxu0 0
    %191 = vmatpush1.bf16.msra.mxu0 %v80
    %192 = vmatprep.subr.bf16.mxu0 0
    %193 = vmatpush1.bf16.msra.mxu0 0
    %194 = vmatprep.subr.bf16.mxu0 0
    %195 = vmatpush1.bf16.msra.mxu0 0
    %196 = vmatprep.subr.bf16.mxu0 0
    %197 = vmatpush1.bf16.msra.mxu0 0
    %198 = vmatprep.subr.bf16.mxu0 0
    %199 = vmatpush1.bf16.msra.mxu0 0
    %200 = vmatprep.subr.bf16.mxu0 0
    %201 = vmatpush1.bf16.msra.mxu0 0
    %202 = vmatprep.subr.bf16.mxu0 0
    %203 = vmatpush1.bf16.msra.mxu0 0
    %204 = vmatprep.subr.bf16.mxu0 0
    %205 = vmatpush1.bf16.msra.mxu0 0
    %206 = vmatprep.subr.bf16.mxu0 0
    %207 = vmatpush1.bf16.msra.mxu0 0
    %208 = vmatprep.subr.bf16.mxu0 0
    %209 = vmatpush1.bf16.msra.mxu0 0
    %210 = vmatprep.subr.bf16.mxu0 0
    %211 = vmatpush1.bf16.msra.mxu0 0
    %212 = vmatprep.subr.bf16.mxu0 0
    %213 = vmatpush1.bf16.msra.mxu0 0
    %214 = vmatprep.subr.bf16.mxu0 0
    %215 = vmatpush1.bf16.msra.mxu0 0
    %216 = vmatprep.subr.bf16.mxu0 0
    %217 = vmatpush1.bf16.msra.mxu0 0
    %218 = vmatprep.subr.bf16.mxu0 0
    %219 = vmatpush1.bf16.msra.mxu0 0
    %220 = vmatprep.mubr.bf16.mxu0 0
    %221 = vmatmul.mubr.bf16.gmra.mrb[0].mxu0 %v186
    %v222 = vpop.f32.mrb[0].mxu0
    %v223 = vadd.f32 0.0, %v222
    %v224 = vpop.f32.mrb[0].mxu0
    %v225 = vpop.f32.mrb[0].mxu0
    %v226 = vpop.f32.mrb[0].mxu0
    %227 = vdwg.mxu0
    %v228 = vadd.f32 %v183, %v223
    %v229 = vtanh.pop %v228
    %s230 = scalar_lea.vmem [#allocation2], 16
    %v231 = vld [vmem:[%s230] sm:$0xf]
    %v232 = vunpack.c.l.bf16 %v231
    %v233 = vpack.c.bf16 %v181, %v181
    %v235 = vsel %vm83, %v233, 0
    %237 = vmatprep.subr.bf16.mxu0 0
    %238 = vmatpush1.bf16.msra.mxu0 %v79
    %239 = vmatprep.subr.bf16.mxu0 0
    %240 = vmatpush1.bf16.msra.mxu0 %v80
    %241 = vmatprep.subr.bf16.mxu0 0
    %242 = vmatpush1.bf16.msra.mxu0 0
    %243 = vmatprep.subr.bf16.mxu0 0
    %244 = vmatpush1.bf16.msra.mxu0 0
    %245 = vmatprep.subr.bf16.mxu0 0
    %246 = vmatpush1.bf16.msra.mxu0 0
    %247 = vmatprep.subr.bf16.mxu0 0
    %248 = vmatpush1.bf16.msra.mxu0 0
    %249 = vmatprep.subr.bf16.mxu0 0
    %250 = vmatpush1.bf16.msra.mxu0 0
    %251 = vmatprep.subr.bf16.mxu0 0
    %252 = vmatpush1.bf16.msra.mxu0 0
    %253 = vmatprep.subr.bf16.mxu0 0
    %254 = vmatpush1.bf16.msra.mxu0 0
    %255 = vmatprep.subr.bf16.mxu0 0
    %256 = vmatpush1.bf16.msra.mxu0 0
    %257 = vmatprep.subr.bf16.mxu0 0
    %258 = vmatpush1.bf16.msra.mxu0 0
    %259 = vmatprep.subr.bf16.mxu0 0
    %260 = vmatpush1.bf16.msra.mxu0 0
    %261 = vmatprep.subr.bf16.mxu0 0
    %262 = vmatpush1.bf16.msra.mxu0 0
    %263 = vmatprep.subr.bf16.mxu0 0
    %264 = vmatpush1.bf16.msra.mxu0 0
    %265 = vmatprep.subr.bf16.mxu0 0
    %266 = vmatpush1.bf16.msra.mxu0 0
    %267 = vmatprep.subr.bf16.mxu0 0
    %268 = vmatpush1.bf16.msra.mxu0 0
    %269 = vmatprep.mubr.bf16.mxu0 0
    %270 = vmatmul.mubr.bf16.gmra.mrb[0].mxu0 %v235
    %v271 = vpop.f32.mrb[0].mxu0
    %v272 = vadd.f32 0.0, %v271
    %v273 = vpop.f32.mrb[0].mxu0
    %v274 = vpop.f32.mrb[0].mxu0
    %v275 = vpop.f32.mrb[0].mxu0
    %276 = vdwg.mxu0
    %v277 = vadd.f32 %v232, %v272
    %v278 = vtanh.pop %v277
    %v279 = vld [vmem:[%s230 + $0x4] sm:$0xf]
    %v280 = vunpack.c.l.bf16 %v279
    %v281 = vpack.c.bf16 %v229, %v229
    %v283 = vsel %vm83, %v281, 0
    %285 = vmatprep.subr.bf16.mxu0 0
    %286 = vmatpush1.bf16.msra.mxu0 %v79
    %287 = vmatprep.subr.bf16.mxu0 0
    %288 = vmatpush1.bf16.msra.mxu0 %v80
    %289 = vmatprep.subr.bf16.mxu0 0
    %290 = vmatpush1.bf16.msra.mxu0 0
    %291 = vmatprep.subr.bf16.mxu0 0
    %292 = vmatpush1.bf16.msra.mxu0 0
    %293 = vmatprep.subr.bf16.mxu0 0
    %294 = vmatpush1.bf16.msra.mxu0 0
    %295 = vmatprep.subr.bf16.mxu0 0
    %296 = vmatpush1.bf16.msra.mxu0 0
    %297 = vmatprep.subr.bf16.mxu0 0
    %298 = vmatpush1.bf16.msra.mxu0 0
    %299 = vmatprep.subr.bf16.mxu0 0
    %300 = vmatpush1.bf16.msra.mxu0 0
    %301 = vmatprep.subr.bf16.mxu0 0
    %302 = vmatpush1.bf16.msra.mxu0 0
    %303 = vmatprep.subr.bf16.mxu0 0
    %304 = vmatpush1.bf16.msra.mxu0 0
    %305 = vmatprep.subr.bf16.mxu0 0
    %306 = vmatpush1.bf16.msra.mxu0 0
    %307 = vmatprep.subr.bf16.mxu0 0
    %308 = vmatpush1.bf16.msra.mxu0 0
    %309 = vmatprep.subr.bf16.mxu0 0
    %310 = vmatpush1.bf16.msra.mxu0 0
    %311 = vmatprep.subr.bf16.mxu0 0
    %312 = vmatpush1.bf16.msra.mxu0 0
    %313 = vmatprep.subr.bf16.mxu0 0
    %314 = vmatpush1.bf16.msra.mxu0 0
    %315 = vmatprep.subr.bf16.mxu0 0
    %316 = vmatpush1.bf16.msra.mxu0 0
    %317 = vmatprep.mubr.bf16.mxu0 0
    %318 = vmatmul.mubr.bf16.gmra.mrb[0].mxu0 %v283
    %v319 = vpop.f32.mrb[0].mxu0
    %v320 = vadd.f32 0.0, %v319
    %v321 = vpop.f32.mrb[0].mxu0
    %v322 = vpop.f32.mrb[0].mxu0
    %v323 = vpop.f32.mrb[0].mxu0
    %324 = vdwg.mxu0
    %v325 = vadd.f32 %v280, %v320
    %v326 = vtanh.pop %v325
    %s327 = scalar_lea.vmem [#allocation2], 24
    %v328 = vld [vmem:[%s327] sm:$0xf]
    %v329 = vunpack.c.l.bf16 %v328
    %v330 = vpack.c.bf16 %v278, %v278
    %v332 = vsel %vm83, %v330, 0
    %334 = vmatprep.subr.bf16.mxu0 0
    %335 = vmatpush1.bf16.msra.mxu0 %v79
    %336 = vmatprep.subr.bf16.mxu0 0
    %337 = vmatpush1.bf16.msra.mxu0 %v80
    %338 = vmatprep.subr.bf16.mxu0 0
    %339 = vmatpush1.bf16.msra.mxu0 0
    %340 = vmatprep.subr.bf16.mxu0 0
    %341 = vmatpush1.bf16.msra.mxu0 0
    %342 = vmatprep.subr.bf16.mxu0 0
    %343 = vmatpush1.bf16.msra.mxu0 0
    %344 = vmatprep.subr.bf16.mxu0 0
    %345 = vmatpush1.bf16.msra.mxu0 0
    %346 = vmatprep.subr.bf16.mxu0 0
    %347 = vmatpush1.bf16.msra.mxu0 0
    %348 = vmatprep.subr.bf16.mxu0 0
    %349 = vmatpush1.bf16.msra.mxu0 0
    %350 = vmatprep.subr.bf16.mxu0 0
    %351 = vmatpush1.bf16.msra.mxu0 0
    %352 = vmatprep.subr.bf16.mxu0 0
    %353 = vmatpush1.bf16.msra.mxu0 0
    %354 = vmatprep.subr.bf16.mxu0 0
    %355 = vmatpush1.bf16.msra.mxu0 0
    %356 = vmatprep.subr.bf16.mxu0 0
    %357 = vmatpush1.bf16.msra.mxu0 0
    %358 = vmatprep.subr.bf16.mxu0 0
    %359 = vmatpush1.bf16.msra.mxu0 0
    %360 = vmatprep.subr.bf16.mxu0 0
    %361 = vmatpush1.bf16.msra.mxu0 0
    %362 = vmatprep.subr.bf16.mxu0 0
    %363 = vmatpush1.bf16.msra.mxu0 0
    %364 = vmatprep.subr.bf16.mxu0 0
    %365 = vmatpush1.bf16.msra.mxu0 0
    %366 = vmatprep.mubr.bf16.mxu0 0
    %367 = vmatmul.mubr.bf16.gmra.mrb[0].mxu0 %v332
    %v368 = vpop.f32.mrb[0].mxu0
    %v369 = vadd.f32 0.0, %v368
    %v370 = vpop.f32.mrb[0].mxu0
    %v371 = vpop.f32.mrb[0].mxu0
    %v372 = vpop.f32.mrb[0].mxu0
    %373 = vdwg.mxu0
    %v374 = vadd.f32 %v329, %v369
    %v375 = vtanh.pop %v374
    %v376 = vld [vmem:[%s327 + $0x4] sm:$0xf]
    %v377 = vunpack.c.l.bf16 %v376
    %v378 = vpack.c.bf16 %v326, %v326
    %v380 = vsel %vm83, %v378, 0
    %382 = vmatprep.subr.bf16.mxu0 0
    %383 = vmatpush1.bf16.msra.mxu0 %v79
    %384 = vmatprep.subr.bf16.mxu0 0
    %385 = vmatpush1.bf16.msra.mxu0 %v80
    %386 = vmatprep.subr.bf16.mxu0 0
    %387 = vmatpush1.bf16.msra.mxu0 0
    %388 = vmatprep.subr.bf16.mxu0 0
    %389 = vmatpush1.bf16.msra.mxu0 0
    %390 = vmatprep.subr.bf16.mxu0 0
    %391 = vmatpush1.bf16.msra.mxu0 0
    %392 = vmatprep.subr.bf16.mxu0 0
    %393 = vmatpush1.bf16.msra.mxu0 0
    %394 = vmatprep.subr.bf16.mxu0 0
    %395 = vmatpush1.bf16.msra.mxu0 0
    %396 = vmatprep.subr.bf16.mxu0 0
    %397 = vmatpush1.bf16.msra.mxu0 0
    %398 = vmatprep.subr.bf16.mxu0 0
    %399 = vmatpush1.bf16.msra.mxu0 0
    %400 = vmatprep.subr.bf16.mxu0 0
    %401 = vmatpush1.bf16.msra.mxu0 0
    %402 = vmatprep.subr.bf16.mxu0 0
    %403 = vmatpush1.bf16.msra.mxu0 0
    %404 = vmatprep.subr.bf16.mxu0 0
    %405 = vmatpush1.bf16.msra.mxu0 0
    %406 = vmatprep.subr.bf16.mxu0 0
    %407 = vmatpush1.bf16.msra.mxu0 0
    %408 = vmatprep.subr.bf16.mxu0 0
    %409 = vmatpush1.bf16.msra.mxu0 0
    %410 = vmatprep.subr.bf16.mxu0 0
    %411 = vmatpush1.bf16.msra.mxu0 0
    %412 = vmatprep.subr.bf16.mxu0 0
    %413 = vmatpush1.bf16.msra.mxu0 0
    %414 = vmatprep.mubr.bf16.mxu0 0
    %415 = vmatmul.mubr.bf16.gmra.mrb[0].mxu0 %v380
    %v416 = vpop.f32.mrb[0].mxu0
    %v417 = vadd.f32 0.0, %v416
    %v418 = vpop.f32.mrb[0].mxu0
    %v419 = vpop.f32.mrb[0].mxu0
    %v420 = vpop.f32.mrb[0].mxu0
    %421 = vdwg.mxu0
    %v422 = vadd.f32 %v377, %v417
    %v423 = vtanh.pop %v422
    %s424 = scalar_lea.vmem [#allocation2], 32
    %v425 = vld [vmem:[%s424] sm:$0xf]
    %v426 = vunpack.c.l.bf16 %v425
    %v427 = vpack.c.bf16 %v375, %v375
    %v429 = vsel %vm83, %v427, 0
    %431 = vmatprep.subr.bf16.mxu0 0
    %432 = vmatpush1.bf16.msra.mxu0 %v79
    %433 = vmatprep.subr.bf16.mxu0 0
    %434 = vmatpush1.bf16.msra.mxu0 %v80
    %435 = vmatprep.subr.bf16.mxu0 0
    %436 = vmatpush1.bf16.msra.mxu0 0
    %437 = vmatprep.subr.bf16.mxu0 0
    %438 = vmatpush1.bf16.msra.mxu0 0
    %439 = vmatprep.subr.bf16.mxu0 0
    %440 = vmatpush1.bf16.msra.mxu0 0
    %441 = vmatprep.subr.bf16.mxu0 0
    %442 = vmatpush1.bf16.msra.mxu0 0
    %443 = vmatprep.subr.bf16.mxu0 0
    %444 = vmatpush1.bf16.msra.mxu0 0
    %445 = vmatprep.subr.bf16.mxu0 0
    %446 = vmatpush1.bf16.msra.mxu0 0
    %447 = vmatprep.subr.bf16.mxu0 0
    %448 = vmatpush1.bf16.msra.mxu0 0
    %449 = vmatprep.subr.bf16.mxu0 0
    %450 = vmatpush1.bf16.msra.mxu0 0
    %451 = vmatprep.subr.bf16.mxu0 0
    %452 = vmatpush1.bf16.msra.mxu0 0
    %453 = vmatprep.subr.bf16.mxu0 0
    %454 = vmatpush1.bf16.msra.mxu0 0
    %455 = vmatprep.subr.bf16.mxu0 0
    %456 = vmatpush1.bf16.msra.mxu0 0
    %457 = vmatprep.subr.bf16.mxu0 0
    %458 = vmatpush1.bf16.msra.mxu0 0
    %459 = vmatprep.subr.bf16.mxu0 0
    %460 = vmatpush1.bf16.msra.mxu0 0
    %461 = vmatprep.subr.bf16.mxu0 0
    %462 = vmatpush1.bf16.msra.mxu0 0
    %463 = vmatprep.mubr.bf16.mxu0 0
    %464 = vmatmul.mubr.bf16.gmra.mrb[0].mxu0 %v429
    %v465 = vpop.f32.mrb[0].mxu0
    %v466 = vadd.f32 0.0, %v465
    %v467 = vpop.f32.mrb[0].mxu0
    %v468 = vpop.f32.mrb[0].mxu0
    %v469 = vpop.f32.mrb[0].mxu0
    %470 = vdwg.mxu0
    %v471 = vadd.f32 %v426, %v466
    %v472 = vtanh.pop %v471
    %v473 = vld [vmem:[%s424 + $0x4] sm:$0xf]
    %v474 = vunpack.c.l.bf16 %v473
    %v475 = vpack.c.bf16 %v423, %v423
    %v477 = vsel %vm83, %v475, 0
    %479 = vmatprep.subr.bf16.mxu0 0
    %480 = vmatpush1.bf16.msra.mxu0 %v79
    %481 = vmatprep.subr.bf16.mxu0 0
    %482 = vmatpush1.bf16.msra.mxu0 %v80
    %483 = vmatprep.subr.bf16.mxu0 0
    %484 = vmatpush1.bf16.msra.mxu0 0
    %485 = vmatprep.subr.bf16.mxu0 0
    %486 = vmatpush1.bf16.msra.mxu0 0
    %487 = vmatprep.subr.bf16.mxu0 0
    %488 = vmatpush1.bf16.msra.mxu0 0
    %489 = vmatprep.subr.bf16.mxu0 0
    %490 = vmatpush1.bf16.msra.mxu0 0
    %491 = vmatprep.subr.bf16.mxu0 0
    %492 = vmatpush1.bf16.msra.mxu0 0
    %493 = vmatprep.subr.bf16.mxu0 0
    %494 = vmatpush1.bf16.msra.mxu0 0
    %495 = vmatprep.subr.bf16.mxu0 0
    %496 = vmatpush1.bf16.msra.mxu0 0
    %497 = vmatprep.subr.bf16.mxu0 0
    %498 = vmatpush1.bf16.msra.mxu0 0
    %499 = vmatprep.subr.bf16.mxu0 0
    %500 = vmatpush1.bf16.msra.mxu0 0
    %501 = vmatprep.subr.bf16.mxu0 0
    %502 = vmatpush1.bf16.msra.mxu0 0
    %503 = vmatprep.subr.bf16.mxu0 0
    %504 = vmatpush1.bf16.msra.mxu0 0
    %505 = vmatprep.subr.bf16.mxu0 0
    %506 = vmatpush1.bf16.msra.mxu0 0
    %507 = vmatprep.subr.bf16.mxu0 0
    %508 = vmatpush1.bf16.msra.mxu0 0
    %509 = vmatprep.subr.bf16.mxu0 0
    %510 = vmatpush1.bf16.msra.mxu0 0
    %511 = vmatprep.mubr.bf16.mxu0 0
    %512 = vmatmul.mubr.bf16.gmra.mrb[0].mxu0 %v477
    %v513 = vpop.f32.mrb[0].mxu0
    %v514 = vadd.f32 0.0, %v513
    %v515 = vpop.f32.mrb[0].mxu0
    %v516 = vpop.f32.mrb[0].mxu0
    %v517 = vpop.f32.mrb[0].mxu0
    %518 = vdwg.mxu0
    %v519 = vadd.f32 %v474, %v514
    %v520 = vtanh.pop %v519
    %s521 = scalar_lea.vmem [#allocation2], 40
    %v522 = vld [vmem:[%s521] sm:$0xf]
    %v523 = vunpack.c.l.bf16 %v522
    %v524 = vpack.c.bf16 %v472, %v472
    %v526 = vsel %vm83, %v524, 0
    %528 = vmatprep.subr.bf16.mxu0 0
    %529 = vmatpush1.bf16.msra.mxu0 %v79
    %530 = vmatprep.subr.bf16.mxu0 0
    %531 = vmatpush1.bf16.msra.mxu0 %v80
    %532 = vmatprep.subr.bf16.mxu0 0
    %533 = vmatpush1.bf16.msra.mxu0 0
    %534 = vmatprep.subr.bf16.mxu0 0
    %535 = vmatpush1.bf16.msra.mxu0 0
    %536 = vmatprep.subr.bf16.mxu0 0
    %537 = vmatpush1.bf16.msra.mxu0 0
    %538 = vmatprep.subr.bf16.mxu0 0
    %539 = vmatpush1.bf16.msra.mxu0 0
    %540 = vmatprep.subr.bf16.mxu0 0
    %541 = vmatpush1.bf16.msra.mxu0 0
    %542 = vmatprep.subr.bf16.mxu0 0
    %543 = vmatpush1.bf16.msra.mxu0 0
    %544 = vmatprep.subr.bf16.mxu0 0
    %545 = vmatpush1.bf16.msra.mxu0 0
    %546 = vmatprep.subr.bf16.mxu0 0
    %547 = vmatpush1.bf16.msra.mxu0 0
    %548 = vmatprep.subr.bf16.mxu0 0
    %549 = vmatpush1.bf16.msra.mxu0 0
    %550 = vmatprep.subr.bf16.mxu0 0
    %551 = vmatpush1.bf16.msra.mxu0 0
    %552 = vmatprep.subr.bf16.mxu0 0
    %553 = vmatpush1.bf16.msra.mxu0 0
    %554 = vmatprep.subr.bf16.mxu0 0
    %555 = vmatpush1.bf16.msra.mxu0 0
    %556 = vmatprep.subr.bf16.mxu0 0
    %557 = vmatpush1.bf16.msra.mxu0 0
    %558 = vmatprep.subr.bf16.mxu0 0
    %559 = vmatpush1.bf16.msra.mxu0 0
    %560 = vmatprep.mubr.bf16.mxu0 0
    %561 = vmatmul.mubr.bf16.gmra.mrb[0].mxu0 %v526
    %v562 = vpop.f32.mrb[0].mxu0
    %v563 = vadd.f32 0.0, %v562
    %v564 = vpop.f32.mrb[0].mxu0
    %v565 = vpop.f32.mrb[0].mxu0
    %v566 = vpop.f32.mrb[0].mxu0
    %567 = vdwg.mxu0
    %v568 = vadd.f32 %v523, %v563
    %v569 = vtanh.pop %v568
    %v570 = vld [vmem:[%s521 + $0x4] sm:$0xf]
    %v571 = vunpack.c.l.bf16 %v570
    %v572 = vpack.c.bf16 %v520, %v520
    %v574 = vsel %vm83, %v572, 0
    %576 = vmatprep.subr.bf16.mxu0 0
    %577 = vmatpush1.bf16.msra.mxu0 %v79
    %578 = vmatprep.subr.bf16.mxu0 0
    %579 = vmatpush1.bf16.msra.mxu0 %v80
    %580 = vmatprep.subr.bf16.mxu0 0
    %581 = vmatpush1.bf16.msra.mxu0 0
    %582 = vmatprep.subr.bf16.mxu0 0
    %583 = vmatpush1.bf16.msra.mxu0 0
    %584 = vmatprep.subr.bf16.mxu0 0
    %585 = vmatpush1.bf16.msra.mxu0 0
    %586 = vmatprep.subr.bf16.mxu0 0
    %587 = vmatpush1.bf16.msra.mxu0 0
    %588 = vmatprep.subr.bf16.mxu0 0
    %589 = vmatpush1.bf16.msra.mxu0 0
    %590 = vmatprep.subr.bf16.mxu0 0
    %591 = vmatpush1.bf16.msra.mxu0 0
    %592 = vmatprep.subr.bf16.mxu0 0
    %593 = vmatpush1.bf16.msra.mxu0 0
    %594 = vmatprep.subr.bf16.mxu0 0
    %595 = vmatpush1.bf16.msra.mxu0 0
    %596 = vmatprep.subr.bf16.mxu0 0
    %597 = vmatpush1.bf16.msra.mxu0 0
    %598 = vmatprep.subr.bf16.mxu0 0
    %599 = vmatpush1.bf16.msra.mxu0 0
    %600 = vmatprep.subr.bf16.mxu0 0
    %601 = vmatpush1.bf16.msra.mxu0 0
    %602 = vmatprep.subr.bf16.mxu0 0
    %603 = vmatpush1.bf16.msra.mxu0 0
    %604 = vmatprep.subr.bf16.mxu0 0
    %605 = vmatpush1.bf16.msra.mxu0 0
    %606 = vmatprep.subr.bf16.mxu0 0
    %607 = vmatpush1.bf16.msra.mxu0 0
    %608 = vmatprep.mubr.bf16.mxu0 0
    %609 = vmatmul.mubr.bf16.gmra.mrb[0].mxu0 %v574
    %v610 = vpop.f32.mrb[0].mxu0
    %v611 = vadd.f32 0.0, %v610
    %v612 = vpop.f32.mrb[0].mxu0
    %v613 = vpop.f32.mrb[0].mxu0
    %v614 = vpop.f32.mrb[0].mxu0
    %615 = vdwg.mxu0
    %v616 = vadd.f32 %v571, %v611
    %v617 = vtanh.pop %v616
    %s618 = scalar_lea.vmem [#allocation2], 48
    %v619 = vld [vmem:[%s618] sm:$0xf]
    %v620 = vunpack.c.l.bf16 %v619
    %v621 = vpack.c.bf16 %v569, %v569
    %v623 = vsel %vm83, %v621, 0
    %625 = vmatprep.subr.bf16.mxu0 0
    %626 = vmatpush1.bf16.msra.mxu0 %v79
    %627 = vmatprep.subr.bf16.mxu0 0
    %628 = vmatpush1.bf16.msra.mxu0 %v80
    %629 = vmatprep.subr.bf16.mxu0 0
    %630 = vmatpush1.bf16.msra.mxu0 0
    %631 = vmatprep.subr.bf16.mxu0 0
    %632 = vmatpush1.bf16.msra.mxu0 0
    %633 = vmatprep.subr.bf16.mxu0 0
    %634 = vmatpush1.bf16.msra.mxu0 0
    %635 = vmatprep.subr.bf16.mxu0 0
    %636 = vmatpush1.bf16.msra.mxu0 0
    %637 = vmatprep.subr.bf16.mxu0 0
    %638 = vmatpush1.bf16.msra.mxu0 0
    %639 = vmatprep.subr.bf16.mxu0 0
    %640 = vmatpush1.bf16.msra.mxu0 0
    %641 = vmatprep.subr.bf16.mxu0 0
    %642 = vmatpush1.bf16.msra.mxu0 0
    %643 = vmatprep.subr.bf16.mxu0 0
    %644 = vmatpush1.bf16.msra.mxu0 0
    %645 = vmatprep.subr.bf16.mxu0 0
    %646 = vmatpush1.bf16.msra.mxu0 0
    %647 = vmatprep.subr.bf16.mxu0 0
    %648 = vmatpush1.bf16.msra.mxu0 0
    %649 = vmatprep.subr.bf16.mxu0 0
    %650 = vmatpush1.bf16.msra.mxu0 0
    %651 = vmatprep.subr.bf16.mxu0 0
    %652 = vmatpush1.bf16.msra.mxu0 0
    %653 = vmatprep.subr.bf16.mxu0 0
    %654 = vmatpush1.bf16.msra.mxu0 0
    %655 = vmatprep.subr.bf16.mxu0 0
    %656 = vmatpush1.bf16.msra.mxu0 0
    %657 = vmatprep.mubr.bf16.mxu0 0
    %658 = vmatmul.mubr.bf16.gmra.mrb[0].mxu0 %v623
    %v659 = vpop.f32.mrb[0].mxu0
    %v660 = vadd.f32 0.0, %v659
    %v661 = vpop.f32.mrb[0].mxu0
    %v662 = vpop.f32.mrb[0].mxu0
    %v663 = vpop.f32.mrb[0].mxu0
    %664 = vdwg.mxu0
    %v665 = vadd.f32 %v620, %v660
    %v666 = vtanh.pop %v665
    %v667 = vld [vmem:[%s618 + $0x4] sm:$0xf]
    %v668 = vunpack.c.l.bf16 %v667
    %v669 = vpack.c.bf16 %v617, %v617
    %v671 = vsel %vm83, %v669, 0
    %673 = vmatprep.subr.bf16.mxu0 0
    %674 = vmatpush1.bf16.msra.mxu0 %v79
    %675 = vmatprep.subr.bf16.mxu0 0
    %676 = vmatpush1.bf16.msra.mxu0 %v80
    %677 = vmatprep.subr.bf16.mxu0 0
    %678 = vmatpush1.bf16.msra.mxu0 0
    %679 = vmatprep.subr.bf16.mxu0 0
    %680 = vmatpush1.bf16.msra.mxu0 0
    %681 = vmatprep.subr.bf16.mxu0 0
    %682 = vmatpush1.bf16.msra.mxu0 0
    %683 = vmatprep.subr.bf16.mxu0 0
    %684 = vmatpush1.bf16.msra.mxu0 0
    %685 = vmatprep.subr.bf16.mxu0 0
    %686 = vmatpush1.bf16.msra.mxu0 0
    %687 = vmatprep.subr.bf16.mxu0 0
    %688 = vmatpush1.bf16.msra.mxu0 0
    %689 = vmatprep.subr.bf16.mxu0 0
    %690 = vmatpush1.bf16.msra.mxu0 0
    %691 = vmatprep.subr.bf16.mxu0 0
    %692 = vmatpush1.bf16.msra.mxu0 0
    %693 = vmatprep.subr.bf16.mxu0 0
    %694 = vmatpush1.bf16.msra.mxu0 0
    %695 = vmatprep.subr.bf16.mxu0 0
    %696 = vmatpush1.bf16.msra.mxu0 0
    %697 = vmatprep.subr.bf16.mxu0 0
    %698 = vmatpush1.bf16.msra.mxu0 0
    %699 = vmatprep.subr.bf16.mxu0 0
    %700 = vmatpush1.bf16.msra.mxu0 0
    %701 = vmatprep.subr.bf16.mxu0 0
    %702 = vmatpush1.bf16.msra.mxu0 0
    %703 = vmatprep.subr.bf16.mxu0 0
    %704 = vmatpush1.bf16.msra.mxu0 0
    %705 = vmatprep.mubr.bf16.mxu0 0
    %706 = vmatmul.mubr.bf16.gmra.mrb[0].mxu0 %v671
    %v707 = vpop.f32.mrb[0].mxu0
    %v708 = vadd.f32 0.0, %v707
    %v709 = vpop.f32.mrb[0].mxu0
    %v710 = vpop.f32.mrb[0].mxu0
    %v711 = vpop.f32.mrb[0].mxu0
    %712 = vdwg.mxu0
    %v713 = vadd.f32 %v668, %v708
    %v714 = vtanh.pop %v713
    %s715 = scalar_lea.vmem [#allocation2], 56
    %v716 = vld [vmem:[%s715] sm:$0xf]
    %v717 = vunpack.c.l.bf16 %v716
    %v718 = vpack.c.bf16 %v666, %v666
    %v720 = vsel %vm83, %v718, 0
    %722 = vmatprep.subr.bf16.mxu0 0
    %723 = vmatpush1.bf16.msra.mxu0 %v79
    %724 = vmatprep.subr.bf16.mxu0 0
    %725 = vmatpush1.bf16.msra.mxu0 %v80
    %726 = vmatprep.subr.bf16.mxu0 0
    %727 = vmatpush1.bf16.msra.mxu0 0
    %728 = vmatprep.subr.bf16.mxu0 0
    %729 = vmatpush1.bf16.msra.mxu0 0
    %730 = vmatprep.subr.bf16.mxu0 0
    %731 = vmatpush1.bf16.msra.mxu0 0
    %732 = vmatprep.subr.bf16.mxu0 0
    %733 = vmatpush1.bf16.msra.mxu0 0
    %734 = vmatprep.subr.bf16.mxu0 0
    %735 = vmatpush1.bf16.msra.mxu0 0
    %736 = vmatprep.subr.bf16.mxu0 0
    %737 = vmatpush1.bf16.msra.mxu0 0
    %738 = vmatprep.subr.bf16.mxu0 0
    %739 = vmatpush1.bf16.msra.mxu0 0
    %740 = vmatprep.subr.bf16.mxu0 0
    %741 = vmatpush1.bf16.msra.mxu0 0
    %742 = vmatprep.subr.bf16.mxu0 0
    %743 = vmatpush1.bf16.msra.mxu0 0
    %744 = vmatprep.subr.bf16.mxu0 0
    %745 = vmatpush1.bf16.msra.mxu0 0
    %746 = vmatprep.subr.bf16.mxu0 0
    %747 = vmatpush1.bf16.msra.mxu0 0
    %748 = vmatprep.subr.bf16.mxu0 0
    %749 = vmatpush1.bf16.msra.mxu0 0
    %750 = vmatprep.subr.bf16.mxu0 0
    %751 = vmatpush1.bf16.msra.mxu0 0
    %752 = vmatprep.subr.bf16.mxu0 0
    %753 = vmatpush1.bf16.msra.mxu0 0
    %754 = vmatprep.mubr.bf16.mxu0 0
    %755 = vmatmul.mubr.bf16.gmra.mrb[0].mxu0 %v720
    %v756 = vpop.f32.mrb[0].mxu0
    %v757 = vadd.f32 0.0, %v756
    %v758 = vpop.f32.mrb[0].mxu0
    %v759 = vpop.f32.mrb[0].mxu0
    %v760 = vpop.f32.mrb[0].mxu0
    %761 = vdwg.mxu0
    %v762 = vadd.f32 %v717, %v757
    %v763 = vtanh.pop %v762
    %v764 = vld [vmem:[%s715 + $0x4] sm:$0xf]
    %v765 = vunpack.c.l.bf16 %v764
    %v766 = vpack.c.bf16 %v714, %v714
    %v768 = vsel %vm83, %v766, 0
    %770 = vmatprep.subr.bf16.mxu0 0
    %771 = vmatpush1.bf16.msra.mxu0 %v79
    %772 = vmatprep.subr.bf16.mxu0 0
    %773 = vmatpush1.bf16.msra.mxu0 %v80
    %774 = vmatprep.subr.bf16.mxu0 0
    %775 = vmatpush1.bf16.msra.mxu0 0
    %776 = vmatprep.subr.bf16.mxu0 0
    %777 = vmatpush1.bf16.msra.mxu0 0
    %778 = vmatprep.subr.bf16.mxu0 0
    %779 = vmatpush1.bf16.msra.mxu0 0
    %780 = vmatprep.subr.bf16.mxu0 0
    %781 = vmatpush1.bf16.msra.mxu0 0
    %782 = vmatprep.subr.bf16.mxu0 0
    %783 = vmatpush1.bf16.msra.mxu0 0
    %784 = vmatprep.subr.bf16.mxu0 0
    %785 = vmatpush1.bf16.msra.mxu0 0
    %786 = vmatprep.subr.bf16.mxu0 0
    %787 = vmatpush1.bf16.msra.mxu0 0
    %788 = vmatprep.subr.bf16.mxu0 0
    %789 = vmatpush1.bf16.msra.mxu0 0
    %790 = vmatprep.subr.bf16.mxu0 0
    %791 = vmatpush1.bf16.msra.mxu0 0
    %792 = vmatprep.subr.bf16.mxu0 0
    %793 = vmatpush1.bf16.msra.mxu0 0
    %794 = vmatprep.subr.bf16.mxu0 0
    %795 = vmatpush1.bf16.msra.mxu0 0
    %796 = vmatprep.subr.bf16.mxu0 0
    %797 = vmatpush1.bf16.msra.mxu0 0
    %798 = vmatprep.subr.bf16.mxu0 0
    %799 = vmatpush1.bf16.msra.mxu0 0
    %800 = vmatprep.subr.bf16.mxu0 0
    %801 = vmatpush1.bf16.msra.mxu0 0
    %802 = vmatprep.mubr.bf16.mxu0 0
    %803 = vmatmul.mubr.bf16.gmra.mrb[0].mxu0 %v768
    %v804 = vpop.f32.mrb[0].mxu0
    %v805 = vadd.f32 0.0, %v804
    %v806 = vpop.f32.mrb[0].mxu0
    %v807 = vpop.f32.mrb[0].mxu0
    %v808 = vpop.f32.mrb[0].mxu0
    %809 = vdwg.mxu0
    %v810 = vadd.f32 %v765, %v805
    %v811 = vtanh.pop %v810
    %v812 = vpack.c.bf16 %v763, %v763
    %v814 = vlaneseq
    %v815 = vshrl.u32 %v814, 7
    %v816 = vsub.s32 0, %v815
    %v817 = vrot.slane %v68, %v816
    %v823 = vunpack.c.l.b16 %v64
    %v824 = vunpack.c.l.b16 %v65
    %v825 = vunpack.c.l.b16 %v66
    %v826 = vunpack.c.l.b16 %v67
    %v827 = vpack.c.b16 %v824, %v823
    %v828 = vpack.c.b16 %v826, %v825
    %v832 = vsel %vm83, %v812, 0
    %834 = vmatprep.subr.bf16.mxu0 0
    %835 = vmatpush1.bf16.msra.mxu0 %v827
    %836 = vmatprep.subr.bf16.mxu0 0
    %837 = vmatpush1.bf16.msra.mxu0 %v828
    %838 = vmatprep.subr.bf16.mxu0 0
    %839 = vmatpush1.bf16.msra.mxu0 0
    %840 = vmatprep.subr.bf16.mxu0 0
    %841 = vmatpush1.bf16.msra.mxu0 0
    %842 = vmatprep.subr.bf16.mxu0 0
    %843 = vmatpush1.bf16.msra.mxu0 0
    %844 = vmatprep.subr.bf16.mxu0 0
    %845 = vmatpush1.bf16.msra.mxu0 0
    %846 = vmatprep.subr.bf16.mxu0 0
    %847 = vmatpush1.bf16.msra.mxu0 0
    %848 = vmatprep.subr.bf16.mxu0 0
    %849 = vmatpush1.bf16.msra.mxu0 0
    %850 = vmatprep.subr.bf16.mxu0 0
    %851 = vmatpush1.bf16.msra.mxu0 0
    %852 = vmatprep.subr.bf16.mxu0 0
    %853 = vmatpush1.bf16.msra.mxu0 0
    %854 = vmatprep.subr.bf16.mxu0 0
    %855 = vmatpush1.bf16.msra.mxu0 0
    %856 = vmatprep.subr.bf16.mxu0 0
    %857 = vmatpush1.bf16.msra.mxu0 0
    %858 = vmatprep.subr.bf16.mxu0 0
    %859 = vmatpush1.bf16.msra.mxu0 0
    %860 = vmatprep.subr.bf16.mxu0 0
    %861 = vmatpush1.bf16.msra.mxu0 0
    %862 = vmatprep.subr.bf16.mxu0 0
    %863 = vmatpush1.bf16.msra.mxu0 0
    %864 = vmatprep.subr.bf16.mxu0 0
    %865 = vmatpush1.bf16.msra.mxu0 0
    %866 = vmatprep.mubr.bf16.mxu0 0
    %867 = vmatmul.mubr.bf16.gmra.mrb[0].mxu0 %v832
    %v868 = vpop.f32.mrb[0].mxu0
    %v869 = vadd.f32 %v817, %v868
    %v870 = vpop.f32.mrb[0].mxu0
    %v871 = vpop.f32.mrb[0].mxu0
    %v872 = vpop.f32.mrb[0].mxu0
    %873 = vdwg.mxu0
    %874 = vst [vmem:[#allocation8] sm:$0xff] %v869
    %v875 = vpack.c.bf16 %v811, %v811
    %v877 = vsel %vm83, %v875, 0
    %879 = vmatprep.subr.bf16.mxu0 0
    %880 = vmatpush1.bf16.msra.mxu0 %v827
    %881 = vmatprep.subr.bf16.mxu0 0
    %882 = vmatpush1.bf16.msra.mxu0 %v828
    %883 = vmatprep.subr.bf16.mxu0 0
    %884 = vmatpush1.bf16.msra.mxu0 0
    %885 = vmatprep.subr.bf16.mxu0 0
    %886 = vmatpush1.bf16.msra.mxu0 0
    %887 = vmatprep.subr.bf16.mxu0 0
    %888 = vmatpush1.bf16.msra.mxu0 0
    %889 = vmatprep.subr.bf16.mxu0 0
    %890 = vmatpush1.bf16.msra.mxu0 0
    %891 = vmatprep.subr.bf16.mxu0 0
    %892 = vmatpush1.bf16.msra.mxu0 0
    %893 = vmatprep.subr.bf16.mxu0 0
    %894 = vmatpush1.bf16.msra.mxu0 0
    %895 = vmatprep.subr.bf16.mxu0 0
    %896 = vmatpush1.bf16.msra.mxu0 0
    %897 = vmatprep.subr.bf16.mxu0 0
    %898 = vmatpush1.bf16.msra.mxu0 0
    %899 = vmatprep.subr.bf16.mxu0 0
    %900 = vmatpush1.bf16.msra.mxu0 0
    %901 = vmatprep.subr.bf16.mxu0 0
    %902 = vmatpush1.bf16.msra.mxu0 0
    %903 = vmatprep.subr.bf16.mxu0 0
    %904 = vmatpush1.bf16.msra.mxu0 0
    %905 = vmatprep.subr.bf16.mxu0 0
    %906 = vmatpush1.bf16.msra.mxu0 0
    %907 = vmatprep.subr.bf16.mxu0 0
    %908 = vmatpush1.bf16.msra.mxu0 0
    %909 = vmatprep.subr.bf16.mxu0 0
    %910 = vmatpush1.bf16.msra.mxu0 0
    %911 = vmatprep.mubr.bf16.mxu0 0
    %912 = vmatmul.mubr.bf16.gmra.mrb[0].mxu0 %v877
    %v913 = vpop.f32.mrb[0].mxu0
    %v914 = vadd.f32 %v817, %v913
    %v915 = vpop.f32.mrb[0].mxu0
    %v916 = vpop.f32.mrb[0].mxu0
    %v917 = vpop.f32.mrb[0].mxu0
    %918 = vdwg.mxu0
    %919 = vst [vmem:[#allocation8 + $0x8] sm:$0xff] %v914
    // Predicated region
    $region30: #{tpu_custom_call.1} parent=1 // pred_check
      _
    $region31: #{tpu_custom_call.1} parent=1 // pred_check_branch
      %921 = sbr.rel (0) target = $region33
    $region32: #{tpu_custom_call.1} parent=1 // pred_region
      %s923 = ssub.s32 256, 256
      %924 = vsyncadd [#allocation4], %s923
      %s925 = sshll.u32 [#allocation8], 4
      %s926 = int_to_ptr.vmem [resolvable:$true] %s925
      %931 = dma.vmem_to_hbm [thread:$0]  %s926, 256, %s4, [#allocation4], 128, 128, 8
    $region33: #{tpu_custom_call.1} parent=1 // pred_fallthru
      _
    // Predicated region
    $region34: #{tpu_custom_call.1} parent=1 // pred_check
      _
    $region35: #{tpu_custom_call.1} parent=1 // pred_check_branch
      %933 = sbr.rel (0) target = $region37
    $region36: #{tpu_custom_call.1} parent=1 // pred_region
      %934 = dma.done [#allocation4], 256
    $region37: #{tpu_custom_call.1} parent=1 // pred_fallthru
      _
    %935 = vsyncpa [#allocation3], 1
    %936 = vsyncpa [#allocation6], 1
    %937 = vsyncpa [#allocation4], 1

</llo_original>
